<compile_context>
chip_gen: v5e
topology: v5e:2x2
jax: 0.10.0
libtpu: 0.0.40
codegen_flags: <defaults>
</compile_context>

<pallas_src>
import functools

import jax
import jax.numpy as jnp
from jax.experimental import pallas as pl
from jax.experimental.pallas import tpu as pltpu


def _round_up(n, m):
    return ((n + m - 1) // m) * m


def _cdiv(a, b):
    return -(-a // b)


def _pa_kernel(w_ref, b_ref, x_ref, o_ref):
    # w_ref : (C, C)        conv1x1 weight, w[co, ci] (resident in VMEM)
    # b_ref : (C, 1)        bias (f32)                (resident in VMEM)
    # x_ref : (Bt, C, TS)   spatial-on-lane slab(s)
    # o_ref : (Bt, C, TS)
    bt = x_ref.shape[0]            # static
    w = w_ref[...]
    bias = b_ref[...]
    for b in range(bt):            # trace-time unrolled; Bt is small
        xb = x_ref[b]                                              # (C, TS)
        y = jnp.dot(w, xb, preferred_element_type=jnp.float32)     # MXU, f32 acc
        y = jax.nn.sigmoid(y + bias)                               # EUP
        # Gating multiply in the activation dtype: drops the (C,TS) f32 copy
        # of x and halves VPU work for bf16 (no-op cast for f32).
        o_ref[b] = xb * y.astype(xb.dtype)


def _choose_tiles(B, C, S, itemsize, tile_s=None, tile_b=None):
    """Pick (batch_tile, spatial_tile) so each grid step is fat (multi-MiB of
    HBM traffic), fits the per-step VMEM budget, and the grid keeps >= 2
    steps for v7x's two TensorCores whenever possible."""
    S_pad = _round_up(S, 128)
    pack = max(1, 4 // itemsize)               # sublane packing factor
    c_sub_in = _round_up(C, 8 * pack)          # sublane-padded C, input dtype
    c_sub_f32 = _round_up(C, 8)                # sublane-padded C, f32 temps

    VMEM_BUDGET = 36 * 1024 * 1024             # tiles + temps (limit = 48 MiB)
    STEP_TRAFFIC = 4 * 1024 * 1024             # target HBM bytes (in+out)/step

    # Resident operands (double-buffered by the pipeline even though constant).
    resident = (2 * c_sub_in * _round_up(C, 128) * itemsize   # weight
                + 2 * c_sub_f32 * 128 * 4)                    # bias
    budget = max(VMEM_BUDGET - resident, 4 * 1024 * 1024)

    def vmem_cost(bt, ts):
        # double-buffered in + out tiles, plus two f32 (C, ts) temporaries
        # (pre-sigmoid y and its sigmoid) per batch element in the block.
        return 4 * bt * c_sub_in * ts * itemsize + 2 * bt * c_sub_f32 * ts * 4

    # ---- spatial tile ----------------------------------------------------
    if tile_s is not None:
        ts = min(S, max(128, _round_up(int(tile_s), 128)))
        if ts >= S_pad:
            ts = S                              # full-extent block is legal
    else:
        ts = max(128, (budget // vmem_cost(1, 1)) // 128 * 128)
        if ts >= S_pad:
            ts = S                              # single full-extent spatial block
    spatial_blocks = _cdiv(S, ts)

    # ---- batch tile ------------------------------------------------------
    if tile_b is not None:
        bt = max(1, min(int(tile_b), B))
    else:
        bt = 1
        if spatial_blocks == 1:
            # A single (C, S) slab is thin (small C and/or S): fatten the step
            # with more batch elements until it hits the traffic target or the
            # VMEM budget.
            while (bt < B
                   and 2 * bt * C * ts * itemsize < STEP_TRAFFIC
                   and vmem_cost(bt + 1, ts) <= budget):
                bt += 1
        if B >= 2:
            bt = min(bt, B // 2)                # keep >= 2 grid steps (v7x 2 TCs)
    while B % bt:                               # avoid partial batch blocks
        bt -= 1

    # If the grid would still collapse to a single fat step, split the spatial
    # axis so both v7x TensorCores get work (costs one extra ~0.35us step).
    if B // bt == 1 and spatial_blocks == 1 and S >= 256 and tile_s is None:
        ts = _round_up(_cdiv(S, 2), 128)

    return bt, ts


@functools.partial(jax.jit, static_argnames=("tile_s", "tile_b"))
def pa_module_forward(x_nchw, weight, bias, tile_s=None, tile_b=None):
    """x_nchw: (B, C, H, W); weight: (C_out, C_in, 1, 1); bias: (C_out,)."""
    B, C, H, W = x_nchw.shape
    assert weight.shape[0] == C and weight.shape[1] == C, weight.shape
    S = H * W

    # Free reshapes: no HBM data movement (layouts already contiguous).
    x3d = x_nchw.reshape(B, C, S)
    # Weight is cast to the activation dtype (bf16 weights for bf16 activations:
    # small deviation from the f32 PyTorch conv, documented and accepted).
    w2d = weight.reshape(C, C).astype(x_nchw.dtype)
    b2d = bias.reshape(C, 1).astype(jnp.float32)   # f32 accumulation

    itemsize = jnp.dtype(x_nchw.dtype).itemsize
    bt, ts = _choose_tiles(B, C, S, itemsize, tile_s, tile_b)

    grid = (_cdiv(B, bt), _cdiv(S, ts))   # partial spatial tail is masked

    cost = pl.CostEstimate(
        flops=2 * B * S * C * C + B * S * C,
        transcendentals=B * S * C,
        bytes_accessed=2 * B * C * S * itemsize
        + (C * C + C) * jnp.dtype(weight.dtype).itemsize,
    )

    out3d = pl.pallas_call(
        _pa_kernel,
        out_shape=jax.ShapeDtypeStruct((B, C, S), x_nchw.dtype),
        grid_spec=pltpu.PrefetchScalarGridSpec(
            num_scalar_prefetch=0,
            grid=grid,
            in_specs=[
                pl.BlockSpec((C, C), lambda b, s: (0, 0)),          # weight (resident)
                pl.BlockSpec((C, 1), lambda b, s: (0, 0)),          # bias   (resident)
                pl.BlockSpec((bt, C, ts), lambda b, s: (b, 0, s)),  # x slab(s)
            ],
            out_specs=pl.BlockSpec((bt, C, ts), lambda b, s: (b, 0, s)),
        ),
        compiler_params=pltpu.CompilerParams(
            dimension_semantics=("parallel", "parallel"),  # shards across v7x's 2 TCs
            vmem_limit_bytes=48 * 1024 * 1024,             # <= v7x 64 MiB/TC physical
        ),
        cost_estimate=cost,
    )(w2d, b2d, x3d)

    return out3d.reshape(B, C, H, W)


def _reference(x_nchw, weight, bias):
    # Pure-JAX reference of the PyTorch forward (1x1 conv = einsum over C).
    y = jnp.einsum("bchw,oc->bohw", x_nchw, weight.reshape(weight.shape[0], -1))
    y = y + bias[None, :, None, None]
    y = jax.nn.sigmoid(y)
    return x_nchw * y


if __name__ == "__main__":
    key = jax.random.PRNGKey(0)
    B, C, H, W = 2, 4, 16, 16          # nf = 4
    kx, kw, kb = jax.random.split(key, 3)

    x = jax.random.normal(kx, (B, C, H, W), dtype=jnp.float32)
    # Deterministic synthetic Conv2d(nf, nf, 1) parameters.
    weight = jax.random.normal(kw, (C, C, 1, 1), dtype=jnp.float32) * 0.1
    bias = jax.random.normal(kb, (C,), dtype=jnp.float32) * 0.1

    out = pa_module_forward(x, weight, bias)
    out = jax.block_until_ready(out)

    ref = _reference(x, weight, bias)
    assert out.shape == (B, C, H, W), out.shape
    assert jnp.allclose(out, ref, atol=1e-5, rtol=1e-5), float(
        jnp.max(jnp.abs(out - ref)))

    print("KERNEL_OK")
</pallas_src>

<mosaic_0001>
module attributes {stable_mosaic.version = 11 : i64} {
  func.func @_pa_kernel(%arg0: i32, %arg1: i32, %arg2: memref<4x4xf32, #tpu.memory_space<vmem>>, %arg3: memref<4x1xf32, #tpu.memory_space<vmem>>, %arg4: memref<1x4x256xf32, #tpu.memory_space<vmem>>, %arg5: memref<1x4x256xf32, #tpu.memory_space<vmem>>) attributes {dimension_semantics = [#tpu.dimension_semantics<parallel>, #tpu.dimension_semantics<parallel>], iteration_bounds = array<i64: 2, 1>, scalar_prefetch = 0 : i64, scratch_operands = 0 : i64, tpu.core_type = #tpu.core_type<tc>, window_params = [{pipeline_mode = #tpu.pipeline_mode<synchronous>, transform_indices = @transform_0, window_bounds = array<i64: 4, 4>}, {pipeline_mode = #tpu.pipeline_mode<synchronous>, transform_indices = @transform_1, window_bounds = array<i64: 4, 1>}, {transform_indices = @transform_2, window_bounds = array<i64: 1, 4, 256>}, {transform_indices = @transform_3, window_bounds = array<i64: 1, 4, 256>}]} {
    %c0 = arith.constant 0 : index
    %c0_0 = arith.constant 0 : index
    %0 = vector.load %arg2[%c0, %c0_0] : memref<4x4xf32, #tpu.memory_space<vmem>>, vector<4x4xf32>
    %c0_1 = arith.constant 0 : index
    %c0_2 = arith.constant 0 : index
    %1 = vector.load %arg3[%c0_1, %c0_2] : memref<4x1xf32, #tpu.memory_space<vmem>>, vector<4x1xf32>
    %c0_3 = arith.constant 0 : index
    %c0_4 = arith.constant 0 : index
    %c0_5 = arith.constant 0 : index
    %2 = vector.load %arg4[%c0_3, %c0_4, %c0_5] : memref<1x4x256xf32, #tpu.memory_space<vmem>>, vector<1x4x256xf32>
    %3 = vector.shape_cast %2 : vector<1x4x256xf32> to vector<4x256xf32>
    %cst = arith.constant dense<0.000000e+00> : vector<4x256xf32>
    %4 = tpu.matmul %0, %3, %cst {dimension_numbers = #tpu.dot_dimension_numbers<[1], [0], [0], [1], [0, 0, 1, 1], [], []>} : vector<4x4xf32>, vector<4x256xf32>, vector<4x256xf32> -> vector<4x256xf32>
    %5 = vector.broadcast %1 : vector<4x1xf32> to vector<4x256xf32>
    %6 = arith.addf %4, %5 : vector<4x256xf32>
    %7 = arith.negf %6 : vector<4x256xf32>
    %8 = math.exp %7 : vector<4x256xf32>
    %cst_6 = arith.constant 1.000000e+00 : f32
    %9 = vector.broadcast %cst_6 : f32 to vector<4x256xf32>
    %10 = arith.addf %9, %8 : vector<4x256xf32>
    %11 = arith.divf %9, %10 : vector<4x256xf32>
    %12 = arith.mulf %3, %11 : vector<4x256xf32>
    %c0_7 = arith.constant 0 : index
    %c0_8 = arith.constant 0 : index
    %c0_9 = arith.constant 0 : index
    %13 = vector.load %arg5[%c0_7, %c0_8, %c0_9] : memref<1x4x256xf32, #tpu.memory_space<vmem>>, vector<1x4x256xf32>
    %14 = vector.shape_cast %13 : vector<1x4x256xf32> to vector<4x256xf32>
    %15 = vector.shape_cast %12 : vector<4x256xf32> to vector<1x4x256xf32>
    tpu.vector_store %arg5[%c0_7, %c0_8, %c0_9], %15 {strides = array<i32>} : memref<1x4x256xf32, #tpu.memory_space<vmem>>, vector<1x4x256xf32>,
    return
  }
  func.func @transform_0(%arg0: i32, %arg1: i32) -> (i32, i32) {
    %c0_i32 = arith.constant 0 : i32
    %c0_i32_0 = arith.constant 0 : i32
    %c0_i32_1 = arith.constant 0 : i32
    return %c0_i32, %c0_i32_0 : i32, i32
  }
  func.func @transform_1(%arg0: i32, %arg1: i32) -> (i32, i32) {
    %c0_i32 = arith.constant 0 : i32
    %c0_i32_0 = arith.constant 0 : i32
    %c0_i32_1 = arith.constant 0 : i32
    return %c0_i32, %c0_i32_0 : i32, i32
  }
  func.func @transform_2(%arg0: i32, %arg1: i32) -> (i32, i32, i32) {
    %c0_i32 = arith.constant 0 : i32
    %c0_i32_0 = arith.constant 0 : i32
    return %arg0, %c0_i32, %arg1 : i32, i32, i32
  }
  func.func @transform_3(%arg0: i32, %arg1: i32) -> (i32, i32, i32) {
    %c0_i32 = arith.constant 0 : i32
    %c0_i32_0 = arith.constant 0 : i32
    return %arg0, %c0_i32, %arg1 : i32, i32, i32
  }
}

</mosaic_0001>

<llo_original>
// kernel: pa_module_forward.1
$region0: #{pa_module_forward.1}
  #allocation0 [shape = 'u32[]', space=smem, size = 0x4, offset = 0x4, fixed_abs, tag = 'smem constant byte address 0x4 - core index']
  #allocation1 [shape = 'u32[72,128]{1,0:T(1,128)}', space=vmem, size = 0x9000, scoped, tag = 'internal scratch']
  %s0 = inlined_call_operand.vmem [shape: f32[4,4], index: 0, kind: input, shape index: {}]
  %s1 = inlined_call_operand.vmem [shape: f32[4,1], index: 1, kind: input, shape index: {}]
  %s2 = inlined_call_operand.vmem [shape: f32[2,4,256], index: 2, kind: input, shape index: {}]
  %s3 = inlined_call_operand.vmem [shape: f32[2,4,256], index: 3, kind: output, shape index: {}]
  %s4 = sld [smem:[#allocation0]]
  $region45: #{pa_module_forward.1} parent=0
    _
  %s6 = ssub.s32 1, %s4
  %s7 = scalar_select 0, %s6, %s4
  loop: start=0, step=1, limit=4
  $region2: #{pa_module_forward.1} parent=0 // loop_pre_header
    _
  $region3: #{pa_module_forward.1} parent=0 // loop_header
    %s9 = sphi 0, %s13
    %p10 = scmp.ge.s32.totalorder %s9, 4
    %s16 = sphi 0, %s28
    %s17 = sphi 0, %s24
    %s18 = sphi 0, %s16
    %s19 = sphi 0, %s17
    %s20 = sphi 0, %s18
    %s21 = sphi 0, %s19
    %s29 = sphi 0, %s29
    %s31 = sphi 0, %s29
    %s32 = sphi 0, %s31
    %s46 = sphi 0, %s32
    %s50 = sphi 0, %s50
    %s52 = sphi 0, %s50
    %s53 = sphi 0, %s52
    %s67 = sphi 0, %s53
    %s75 = sphi 0, %s77
    %s78 = sphi 0, %s75
    %s79 = sphi 0, %s78
    %s95 = sphi 0, %s79
    %s103 = sphi 0, %s105
    %s106 = sphi 0, %s103
    %s107 = sphi 0, %s106
    %s123 = sphi 0, %s107
  $region4: #{pa_module_forward.1} parent=0 // loop_header_branch
    %12 = sbr.rel (%p10) target = $region8
  $region5: #{pa_module_forward.1} parent=0 // loop_body
    %s14 = ssub.s32 %s9, 1
    %s15 = ssub.s32 %s9, 2
    %s22 = sadd.s32 1, %s17
    %p23 = scmp.ge.s32.totalorder %s22, 1
    %s24 = scalar_select %p23, 0, %s22
    %s25 = sadd.s32 1, %s16
    %s26 = scalar_select %p23, %s25, %s16
    %p27 = scmp.ge.s32.totalorder %s26, 2
    %s28 = scalar_select %p27, 0, %s26
    %s30 = sadd.s32 %s29, 1
    %p33 = scmp.eq.s32.totalorder %s9, 1
    %p34 = scmp.ne.s32.totalorder %s29, %s31
    %p35 = scmp.eq.s32.totalorder %s9, 0
    %p36 = por %p34, %p35
    %p37 = scmp.ne.s32.totalorder %s29, %s31
    %p38 = scmp.eq.s32.totalorder %s14, 1
    %p39 = por %p37, %p38
    %p40 = scmp.ne.s32.totalorder %s31, %s32
    %p41 = scmp.eq.s32.totalorder %s14, 0
    %p42 = por %p40, %p41
    %p43 = scmp.ne.s32.totalorder %s31, %s32
    %p44 = scmp.eq.s32.totalorder %s15, 1
    %p45 = por %p43, %p44
    %p47 = scmp.ne.s32.totalorder %s32, %s46
    %p48 = scmp.eq.s32.totalorder %s15, 0
    %p49 = por %p47, %p48
    %s51 = sadd.s32 %s50, 1
    %p54 = scmp.eq.s32.totalorder %s9, 1
    %p55 = scmp.ne.s32.totalorder %s50, %s52
    %p56 = scmp.eq.s32.totalorder %s9, 0
    %p57 = por %p55, %p56
    %p58 = scmp.ne.s32.totalorder %s50, %s52
    %p59 = scmp.eq.s32.totalorder %s14, 1
    %p60 = por %p58, %p59
    %p61 = scmp.ne.s32.totalorder %s52, %s53
    %p62 = scmp.eq.s32.totalorder %s14, 0
    %p63 = por %p61, %p62
    %p64 = scmp.ne.s32.totalorder %s52, %s53
    %p65 = scmp.eq.s32.totalorder %s15, 1
    %p66 = por %p64, %p65
    %p68 = scmp.ne.s32.totalorder %s53, %s67
    %p69 = scmp.eq.s32.totalorder %s15, 0
    %p70 = por %p68, %p69
    %s71 = ssub.s32 %s16, %s28
    %s72 = ssub.s32 %s17, %s24
    %s73 = sor.u32 %s71, %s72
    %p74 = scmp.eq.s32.totalorder %s73, 0
    %s76 = sadd.s32 %s75, 1
    %s77 = scalar_select %p74, %s75, %s76
    %p80 = pneg %p74
    %p81 = scmp.eq.s32.totalorder %s9, 1
    %p82 = por %p80, %p81
    %p83 = scmp.ne.s32.totalorder %s75, %s78
    %p84 = scmp.eq.s32.totalorder %s9, 0
    %p85 = por %p83, %p84
    %p86 = scmp.ne.s32.totalorder %s75, %s78
    %p87 = scmp.eq.s32.totalorder %s14, 1
    %p88 = por %p86, %p87
    %p89 = scmp.ne.s32.totalorder %s78, %s79
    %p90 = scmp.eq.s32.totalorder %s14, 0
    %p91 = por %p89, %p90
    %p92 = scmp.ne.s32.totalorder %s78, %s79
    %p93 = scmp.eq.s32.totalorder %s15, 1
    %p94 = por %p92, %p93
    %p96 = scmp.ne.s32.totalorder %s79, %s95
    %p97 = scmp.eq.s32.totalorder %s15, 0
    %p98 = por %p96, %p97
    %s99 = ssub.s32 %s16, %s28
    %s100 = ssub.s32 %s17, %s24
    %s101 = sor.u32 %s99, %s100
    %p102 = scmp.eq.s32.totalorder %s101, 0
    %s104 = sadd.s32 %s103, 1
    %s105 = scalar_select %p102, %s103, %s104
    %p108 = pneg %p102
    %p109 = scmp.eq.s32.totalorder %s9, 1
    %p110 = por %p108, %p109
    %p111 = scmp.ne.s32.totalorder %s103, %s106
    %p112 = scmp.eq.s32.totalorder %s9, 0
    %p113 = por %p111, %p112
    %p114 = scmp.ne.s32.totalorder %s103, %s106
    %p115 = scmp.eq.s32.totalorder %s14, 1
    %p116 = por %p114, %p115
    %p117 = scmp.ne.s32.totalorder %s106, %s107
    %p118 = scmp.eq.s32.totalorder %s14, 0
    %p119 = por %p117, %p118
    %p120 = scmp.ne.s32.totalorder %s106, %s107
    %p121 = scmp.eq.s32.totalorder %s15, 1
    %p122 = por %p120, %p121
    %p124 = scmp.ne.s32.totalorder %s107, %s123
    %p125 = scmp.eq.s32.totalorder %s15, 0
    %p126 = por %p124, %p125
    %p127 = scmp.le.s32.totalorder 1, %s9
    %p128 = scmp.lt.s32.totalorder %s9, 3
    %p129 = pnand %p127, %p128
    %p130 = pneg %p129
    // Predicated region
    $region9: #{pa_module_forward.1} parent=5 // pred_check
      _
    $region10: #{pa_module_forward.1} parent=5 // pred_check_branch
      %132 = sbr.rel (%p129) target = $region12
    $region11: #{pa_module_forward.1} parent=5 // pred_region
      %s133 = ssub.s32 %s9, 1
      // Predicated region
      $region13: #{pa_module_forward.1} parent=11 // pred_check
        %p134 = pneg %p42
      $region14: #{pa_module_forward.1} parent=11 // pred_check_branch
        %136 = sbr.rel (%p134) target = $region16
      $region15: #{pa_module_forward.1} parent=11 // pred_region
        _
      $region16: #{pa_module_forward.1} parent=11 // pred_fallthru
        _
      // Predicated region
      $region17: #{pa_module_forward.1} parent=11 // pred_check
        %p137 = pneg %p63
      $region18: #{pa_module_forward.1} parent=11 // pred_check_branch
        %139 = sbr.rel (%p137) target = $region20
      $region19: #{pa_module_forward.1} parent=11 // pred_region
        _
      $region20: #{pa_module_forward.1} parent=11 // pred_fallthru
        _
    $region12: #{pa_module_forward.1} parent=5 // pred_fallthru
      _
    %p140 = scmp.lt.s32.totalorder %s9, 2
    // Predicated region
    $region21: #{pa_module_forward.1} parent=5 // pred_check
      %p141 = pneg %p140
    $region22: #{pa_module_forward.1} parent=5 // pred_check_branch
      %143 = sbr.rel (%p141) target = $region24
    $region23: #{pa_module_forward.1} parent=5 // pred_region
      // Predicated region
      $region25: #{pa_module_forward.1} parent=23 // pred_check
        %p144 = pneg %p85
      $region26: #{pa_module_forward.1} parent=23 // pred_check_branch
        %146 = sbr.rel (%p144) target = $region28
      $region27: #{pa_module_forward.1} parent=23 // pred_region
        %s147 = smul.u32 2, %s17
        %p148 = scmp.lt.s32.totalorder %s16, 1
        %s149 = scalar_select %p148, %s16, 1
        %p150 = scmp.lt.s32.totalorder %s147, 1
        %s151 = scalar_select %p150, %s147, 1
        %s152 = smul.addr %s149, 2
        %s153 = sadd.s32 %s151, %s152
        %s154 = smul.addr %s153, 4
        %s155 = scalar_lea.vmem %s2, %s154
        %s156 = smul.u32 2, %s17
      $region28: #{pa_module_forward.1} parent=23 // pred_fallthru
        _
    $region24: #{pa_module_forward.1} parent=5 // pred_fallthru
      _
    %p157 = scmp.le.s32.totalorder 1, %s9
    %p158 = scmp.lt.s32.totalorder %s9, 3
    %p159 = pnand %p157, %p158
    %p160 = pneg %p159
    // Predicated region
    $region29: #{pa_module_forward.1} parent=5 // pred_check
      _
    $region30: #{pa_module_forward.1} parent=5 // pred_check_branch
      %162 = sbr.rel (%p159) target = $region32
    $region31: #{pa_module_forward.1} parent=5 // pred_region
      %s163 = ssub.s32 %s9, 1
      %p164 = pneg %p42
      %p165 = pneg %p39
      %p166 = pneg %p63
      %p167 = pneg %p60
      %s168 = smul.u32 2, %s19
      %p169 = scmp.lt.s32.totalorder %s18, 1
      %s170 = scalar_select %p169, %s18, 1
      %p171 = scmp.lt.s32.totalorder %s168, 1
      %s172 = scalar_select %p171, %s168, 1
      %s173 = smul.addr %s170, 2
      %s174 = sadd.s32 %s172, %s173
      %s175 = smul.addr %s174, 4
      %s176 = scalar_lea.vmem %s2, %s175
      %p177 = pneg %p91
      %p178 = pneg %p88
      %p179 = pneg %p119
      %p180 = pneg %p116
      %s181 = smul.u32 2, %s19
      %p182 = scmp.lt.s32.totalorder %s18, 1
      %s183 = scalar_select %p182, %s18, 1
      %p184 = scmp.lt.s32.totalorder %s181, 1
      %s185 = scalar_select %p184, %s181, 1
      %s186 = smul.addr %s183, 2
      %s187 = sadd.s32 %s185, %s186
      %s188 = smul.addr %s187, 4
      %s189 = scalar_lea.vmem %s3, %s188
      %s190 = smul.u32 2, %s19
      %p191 = scmp.lt.s32.totalorder %s18, 1
      %s192 = scalar_select %p191, %s18, 1
      %p193 = scmp.lt.s32.totalorder %s190, 1
      %s194 = scalar_select %p193, %s190, 1
      %s195 = smul.addr %s192, 2
      %s196 = sadd.s32 %s194, %s195
      %s197 = smul.addr %s196, 4
      %s198 = scalar_lea.vmem %s2, %s197
      %s199 = smul.u32 2, %s19
      %s200 = smul.u32 2, %s19
      %p201 = scmp.lt.s32.totalorder %s18, 1
      %s202 = scalar_select %p201, %s18, 1
      %p203 = scmp.lt.s32.totalorder %s200, 1
      %s204 = scalar_select %p203, %s200, 1
      %s205 = smul.addr %s202, 2
      %s206 = sadd.s32 %s204, %s205
      %s207 = smul.addr %s206, 4
      %s208 = scalar_lea.vmem %s3, %s207
      %s209 = smul.u32 2, %s19
      %v210 = vld [vmem:[%s0] sm:$0xf]
      %v211 = vld [vmem:[%s1] sm:$0xf]
      %v212 = vld [vmem:[%s198] sm:$0xff]
      %214 = vset.pattern.permute.xlu0 0
      %215 = vperm.xlu0 %214, %v211
      %v216 = vpop.permute.xlu0 %215
      %219 = vst [vmem:[#allocation1] ss:$2 sm:$0xff] %v212
      %v220 = vld.sshfl [vmem:[#allocation1] sm:$0xff pattern:$0x75316420]
      %v221 = vld.sshfl [vmem:[#allocation1 + $0x8] sm:$0xff pattern:$0x75316420]
      %vm222 = vcmask 31744
      %v224 = vsel %vm222, %v210, 0
      %vm226 = vcmask 1043456
      %v227 = vsel %vm226, %v220, 0
      %v229 = vsel %vm226, %v221, 0
      %231 = vmatpush.msra.mxu0 0.0
      %232 = vmatpush.msra.mxu0 0.0
      %233 = vmatpush.msra.mxu0 0.0
      %234 = vmatpush.msra.mxu0 0.0
      %235 = vmatpush.msra.mxu0 0.0
      %236 = vmatpush.msra.mxu0 0.0
      %237 = vmatpush.msra.mxu0 0.0
      %238 = vmatpush.msra.mxu0 0.0
      %239 = vmatpush.msra.mxu0 0.0
      %240 = vmatpush.msra.mxu0 0.0
      %241 = vmatpush.msra.mxu0 0.0
      %242 = vmatpush.msra.mxu0 0.0
      %243 = vmatpush.msra.mxu0 0.0
      %244 = vmatpush.msra.mxu0 0.0
      %245 = vmatpush.msra.mxu0 0.0
      %246 = vmatpush.msra.mxu0 %v227
      %247 = vmatmul.f32.gmra.mxu0 %v224
      %v248 = vpop.f32.mrf.mxu0
      %v249 = vadd.f32 %v216, %v248
      %250 = vdwg.mxu0
      %251 = vmatpush.msra.mxu0 0.0
      %252 = vmatpush.msra.mxu0 0.0
      %253 = vmatpush.msra.mxu0 0.0
      %254 = vmatpush.msra.mxu0 0.0
      %255 = vmatpush.msra.mxu0 0.0
      %256 = vmatpush.msra.mxu0 0.0
      %257 = vmatpush.msra.mxu0 0.0
      %258 = vmatpush.msra.mxu0 0.0
      %259 = vmatpush.msra.mxu0 0.0
      %260 = vmatpush.msra.mxu0 0.0
      %261 = vmatpush.msra.mxu0 0.0
      %262 = vmatpush.msra.mxu0 0.0
      %263 = vmatpush.msra.mxu0 0.0
      %264 = vmatpush.msra.mxu0 0.0
      %265 = vmatpush.msra.mxu0 0.0
      %266 = vmatpush.msra.mxu0 %v229
      %267 = vmatmul.f32.gmra.mxu0 %v224
      %v268 = vpop.f32.mrf.mxu0
      %v269 = vadd.f32 %v216, %v268
      %270 = vdwg.mxu0
      %v271 = vxor.u32 %v249, 2147483648
      %v272 = vxor.u32 %v269, 2147483648
      %v273 = vmul.f32 %v271, 1.442695
      %v274 = vpow.pop %v273
      %v275 = vmul.f32 %v272, 1.442695
      %v276 = vpow.pop %v275
      %v277 = vadd.f32 %v274, 1.0
      %v278 = vadd.f32 %v276, 1.0
      %v279 = vrcp.pop %v277
      %v280 = vmul.f32 %v277, %v279
      %v281 = vsub.f32 1.0, %v280
      %v282 = vmul.f32 %v279, %v281
      %v283 = vadd.f32 %v279, %v282
      %vm284 = vweird.f32 %v277
      %vm285 = vweird.f32 %v279
      %vm286 = vmor %vm284, %vm285
      %v287 = vsel %vm286, %v279, %v283
      %v288 = vand.u32 2147483647, %v277
      %vm289 = vcmp.eq.f32.partialorder %v288, 8.507059e+37
      %v290 = vand.u32 %v277, 2147483648
      %v291 = vor.u32 1.1754944e-38, %v290
      %v292 = vsel %vm289, %v291, %v287
      %v293 = vmul.f32 1.0, %v292
      %v294 = vrcp.pop %v278
      %v295 = vmul.f32 %v278, %v294
      %v296 = vsub.f32 1.0, %v295
      %v297 = vmul.f32 %v294, %v296
      %v298 = vadd.f32 %v294, %v297
      %vm299 = vweird.f32 %v278
      %vm300 = vweird.f32 %v294
      %vm301 = vmor %vm299, %vm300
      %v302 = vsel %vm301, %v294, %v298
      %v303 = vand.u32 2147483647, %v278
      %vm304 = vcmp.eq.f32.partialorder %v303, 8.507059e+37
      %v305 = vand.u32 %v278, 2147483648
      %v306 = vor.u32 1.1754944e-38, %v305
      %v307 = vsel %vm304, %v306, %v302
      %v308 = vmul.f32 1.0, %v307
      %v311 = vrot.slane %v308, 4
      %v312 = vsel %vm226, %v293, %v311
      %v314 = vmul.f32 %v212, %v312
      %315 = vst [vmem:[%s208] sm:$0xff] %v314
      %s316 = smul.u32 2, %s19
      %p317 = scmp.lt.s32.totalorder %s18, 1
      %s318 = scalar_select %p317, %s18, 1
      %p319 = scmp.lt.s32.totalorder %s316, 1
      %s320 = scalar_select %p319, %s316, 1
      %s321 = smul.addr %s318, 2
      %s322 = sadd.s32 %s320, %s321
      %s323 = smul.addr %s322, 4
      %s324 = scalar_lea.vmem %s3, %s323
      // Predicated region
      $region33: #{pa_module_forward.1} parent=31 // pred_check
        %p325 = pneg %p116
      $region34: #{pa_module_forward.1} parent=31 // pred_check_branch
        %327 = sbr.rel (%p325) target = $region36
      $region35: #{pa_module_forward.1} parent=31 // pred_region
        %s328 = smul.u32 2, %s19
      $region36: #{pa_module_forward.1} parent=31 // pred_fallthru
        _
    $region32: #{pa_module_forward.1} parent=5 // pred_fallthru
      _
    %p329 = scmp.le.s32.totalorder 2, %s9
    // Predicated region
    $region37: #{pa_module_forward.1} parent=5 // pred_check
      %p330 = pneg %p329
    $region38: #{pa_module_forward.1} parent=5 // pred_check_branch
      %332 = sbr.rel (%p330) target = $region40
    $region39: #{pa_module_forward.1} parent=5 // pred_region
      %s333 = ssub.s32 %s9, 2
      // Predicated region
      $region41: #{pa_module_forward.1} parent=39 // pred_check
        %p334 = pneg %p122
      $region42: #{pa_module_forward.1} parent=39 // pred_check_branch
        %336 = sbr.rel (%p334) target = $region44
      $region43: #{pa_module_forward.1} parent=39 // pred_region
        %s337 = smul.u32 2, %s21
        %p338 = scmp.lt.s32.totalorder %s20, 1
        %s339 = scalar_select %p338, %s20, 1
        %p340 = scmp.lt.s32.totalorder %s337, 1
        %s341 = scalar_select %p340, %s337, 1
        %s342 = smul.addr %s339, 2
        %s343 = sadd.s32 %s341, %s342
        %s344 = smul.addr %s343, 4
        %s345 = scalar_lea.vmem %s3, %s344
      $region44: #{pa_module_forward.1} parent=39 // pred_fallthru
        _
    $region40: #{pa_module_forward.1} parent=5 // pred_fallthru
      _
  $region6: #{pa_module_forward.1} parent=0 // loop_footer
    %s13 = sadd.s32 1, %s9
  $region7: #{pa_module_forward.1} parent=0 // loop_footer_branch
    %8 = sbr.rel target = $region3
  $region8: #{pa_module_forward.1} parent=0 // loop_exit
    _

</llo_original>
